<compile_context>
chip_gen: v7x
topology: tpu7x:2x2x1
jax: 0.10.0
libtpu: 0.0.40
codegen_flags: <defaults>
</compile_context>

<pallas_src>
import jax
import jax.numpy as jnp
from jax.experimental import pallas as pl
from jax.experimental.pallas import tpu as pltpu


def _poly_kernel(params_ref, x_ref, o_ref):
    # params_ref: SMEM f32[3] = [w1, w2, bias]
    w1 = params_ref[0]
    w2 = params_ref[1]
    b = params_ref[2]
    x = x_ref[...].astype(jnp.float32)
    # Horner form: w1*x + w2*x^2 + bias == (w2*x + w1)*x + bias
    o_ref[...] = ((w2 * x + w1) * x + b).astype(o_ref.dtype)


def nonlinear_regression(x, params, *, lane_width=2048, max_tile_bytes=4 << 20):
    """Elementwise y = w1*x + w2*x^2 + bias.

    x: any-shape float array; params: (3,) f32 = [w1, w2, bias].
    """
    orig_shape = x.shape
    total = int(x.size)
    if total == 0:
        return jnp.zeros(orig_shape, x.dtype)

    params = params.astype(jnp.float32)
    itemsize = x.dtype.itemsize

    # ---- choose a lane-dense 2D view, avoiding pad/slice whenever possible --
    pad_amount = 0
    if (
        x.ndim >= 2
        and x.shape[-1] % 128 == 0
        and x.shape[-1] * itemsize * 8 <= max_tile_bytes
    ):
        # Already lane-aligned: free reshape (collapse leading dims).
        lane = x.shape[-1]
        rows = total // lane
        x2d = x.reshape(rows, lane)
    elif total % lane_width == 0:
        lane = lane_width
        rows = total // lane
        x2d = x.reshape(rows, lane)
    elif total % 128 == 0:
        lane = 128
        rows = total // lane
        x2d = x.reshape(rows, lane)
    else:
        # Single pad to one lane multiple (one extra HBM pass), sliced at end.
        lane = lane_width
        padded = pl.cdiv(total, lane) * lane
        pad_amount = padded - total
        x2d = jnp.pad(x.reshape(-1), (0, pad_amount)).reshape(padded // lane, lane)
        rows = padded // lane

    # ---- tile rows: target ~max_tile_bytes per tile, multiple of 8 ----------
    rows_per_tile = max(8, ((max_tile_bytes // (lane * itemsize)) // 8) * 8)
    if rows <= rows_per_tile:
        tile_rows = rows          # full-extent block (trivially satisfies 8,128)
    else:
        tile_rows = rows_per_tile

    grid = (pl.cdiv(rows, tile_rows),)

    out2d = pl.pallas_call(
        _poly_kernel,
        out_shape=jax.ShapeDtypeStruct((rows, lane), x.dtype),
        grid=grid,
        in_specs=[
            pl.BlockSpec(memory_space=pltpu.MemorySpace.SMEM),        # scalars
            pl.BlockSpec((tile_rows, lane), lambda i: (i, 0)),        # x tile
        ],
        out_specs=pl.BlockSpec((tile_rows, lane), lambda i: (i, 0)),
        compiler_params=pltpu.CompilerParams(
            dimension_semantics=("parallel",),   # independent blocks (megacore)
            vmem_limit_bytes=48 << 20,
        ),
        cost_estimate=pl.CostEstimate(
            flops=4 * rows * lane,
            transcendentals=0,
            bytes_accessed=2 * rows * lane * itemsize,
        ),
    )(params, x2d)

    if pad_amount:
        return out2d.reshape(-1)[:total].reshape(orig_shape)
    return out2d.reshape(orig_shape)


if __name__ == "__main__":
    key = jax.random.PRNGKey(0)
    k_price, k_w, k_noise, k_x = jax.random.split(key, 4)

    # Synthetic "price_data" (drives the deterministic bias init, as in __init__)
    price_data = jax.random.uniform(k_price, (64,), jnp.float32) * 100.0
    price_mean = jnp.mean(price_data)

    # Parameter init (mirrors torch.rand / torch.normal, deterministic here)
    w_init = jax.random.uniform(k_w, (4,), jnp.float32)   # w1..w4 ~ U[0,1)
    w1, w2, w3, w4 = w_init   # w3, w4 unused in forward (parity with module)
    bias = price_mean + 10.0 * jax.random.normal(k_noise, (), jnp.float32)

    params = jnp.stack([w1, w2, bias]).astype(jnp.float32)

    def reference(xx):
        return w1 * xx + w2 * jnp.square(xx) + bias

    # 1) Small, lane-aligned input (fast path, single block).
    x = jax.random.normal(k_x, (32, 128), jnp.float32)
    y = jax.block_until_ready(nonlinear_regression(x, params))
    assert y.shape == x.shape and y.dtype == jnp.float32
    assert jnp.allclose(y, reference(x), rtol=1e-6, atol=1e-5), "aligned mismatch"

    # 2) Aligned, multi-block with a masked tail block (fast path, grid of 3).
    x_tail = jax.random.normal(k_x, (1100, 2048), jnp.float32)
    y_tail = jax.block_until_ready(nonlinear_regression(x_tail, params))
    assert jnp.allclose(y_tail, reference(x_tail), rtol=1e-6, atol=1e-5), \
        "tail-block mismatch"

    # 3) Badly aligned shape (single-pad + slice path).
    x_rag = jax.random.normal(k_x, (300, 70), jnp.float32)
    y_rag = jax.block_until_ready(nonlinear_regression(x_rag, params))
    assert jnp.allclose(y_rag, reference(x_rag), rtol=1e-6, atol=1e-5), \
        "ragged mismatch"

    print("KERNEL_OK")
</pallas_src>

<mosaic_0001>
module attributes {stable_mosaic.version = 11 : i64} {
  func.func @_poly_kernel(%arg0: i32, %arg1: memref<3xf32, #tpu.memory_space<smem>>, %arg2: memref<32x128xf32, #tpu.memory_space<vmem>>, %arg3: memref<32x128xf32, #tpu.memory_space<vmem>>) attributes {dimension_semantics = [#tpu.dimension_semantics<parallel>], iteration_bounds = array<i64: 1>, scalar_prefetch = 0 : i64, scratch_operands = 0 : i64, tpu.core_type = #tpu.core_type<tc>, window_params = [{transform_indices = @transform_0, window_bounds = array<i64: 3>}, {transform_indices = @transform_1, window_bounds = array<i64: 32, 128>}, {transform_indices = @transform_2, window_bounds = array<i64: 32, 128>}]} {
    %c0 = arith.constant 0 : index
    %0 = memref.load %arg1[%c0] : memref<3xf32, #tpu.memory_space<smem>>
    %c1 = arith.constant 1 : index
    %1 = memref.load %arg1[%c1] : memref<3xf32, #tpu.memory_space<smem>>
    %c2 = arith.constant 2 : index
    %2 = memref.load %arg1[%c2] : memref<3xf32, #tpu.memory_space<smem>>
    %c0_0 = arith.constant 0 : index
    %c0_1 = arith.constant 0 : index
    %3 = vector.load %arg2[%c0_0, %c0_1] : memref<32x128xf32, #tpu.memory_space<vmem>>, vector<32x128xf32>
    %4 = vector.broadcast %1 : f32 to vector<32x128xf32>
    %5 = arith.mulf %4, %3 : vector<32x128xf32>
    %6 = vector.broadcast %0 : f32 to vector<32x128xf32>
    %7 = arith.addf %5, %6 : vector<32x128xf32>
    %8 = arith.mulf %7, %3 : vector<32x128xf32>
    %9 = vector.broadcast %2 : f32 to vector<32x128xf32>
    %10 = arith.addf %8, %9 : vector<32x128xf32>
    %c0_2 = arith.constant 0 : index
    %c0_3 = arith.constant 0 : index
    %11 = vector.load %arg3[%c0_2, %c0_3] : memref<32x128xf32, #tpu.memory_space<vmem>>, vector<32x128xf32>
    tpu.vector_store %arg3[%c0_2, %c0_3], %10 {strides = array<i32>} : memref<32x128xf32, #tpu.memory_space<vmem>>, vector<32x128xf32>,
    return
  }
  func.func @transform_0(%arg0: i32) -> i32 {
    %c0_i32 = arith.constant 0 : i32
    %c0_i32_0 = arith.constant 0 : i32
    return %c0_i32 : i32
  }
  func.func @transform_1(%arg0: i32) -> (i32, i32) {
    %c0_i32 = arith.constant 0 : i32
    %c0_i32_0 = arith.constant 0 : i32
    return %arg0, %c0_i32 : i32, i32
  }
  func.func @transform_2(%arg0: i32) -> (i32, i32) {
    %c0_i32 = arith.constant 0 : i32
    %c0_i32_0 = arith.constant 0 : i32
    return %arg0, %c0_i32 : i32, i32
  }
}

</mosaic_0001>

<llo_original>
// kernel: tpu_custom_call.1
$region0: #{tpu_custom_call.1}
  #allocation0 [shape = 'u32[]', space=smem, size = 0x4, offset = 0x4, fixed_abs, tag = 'smem constant byte address 0x4 - core index']
  #allocation1 [shape = 'u32[144,128]{1,0:T(1,128)}', space=vmem, size = 0x12000, scoped, tag = 'internal scratch']
  %s0 = inlined_call_operand.hbm [shape: f32[3], index: 0, kind: input, shape index: {}]
  %s1 = inlined_call_operand.hbm [shape: f32[32,128], index: 1, kind: input, shape index: {}]
  %s2 = inlined_call_operand.hbm [shape: f32[32,128], index: 2, kind: output, shape index: {}]
  %s3 = sld [smem:[#allocation0]]
  $region26: #{tpu_custom_call.1} parent=0
    _
  %s5 = ssub.s32 1, %s3
  %s6 = scalar_select 0, %s5, %s3
  $region1: #{tpu_custom_call.1} parent=0
    #allocation2 [shape = 'u8[512]{0}', space=smem, size = 0x200, scoped, tag = 'input window, operand 0, single buffered']
    #allocation3 [shape = 's32[1]{0}', space=sflag, size = 0x4, scoped, tag = 'scoped memory for tpu_custom_call.1']
    #allocation4 [shape = 's32[1]{0}', space=sflag, size = 0x4, scoped, tag = 'scoped memory for tpu_custom_call.1']
    #allocation5 [shape = 's32[1]{0}', space=sflag, size = 0x4, scoped, tag = 'scoped memory for tpu_custom_call.1']
    #allocation6 [shape = 'u8[16384]{0}', space=vmem, size = 0x4000, scoped, tag = 'input window, operand 1, single buffered']
    #allocation7 [shape = 'u8[16384]{0}', space=vmem, size = 0x4000, scoped, tag = 'output window, operand 0, single buffered']
    %7 = vsyncpa [#allocation5], 0
    %8 = vsyncpa [#allocation3], 0
    %9 = vsyncpa [#allocation4], 0
    // Predicated region
    $region2: #{tpu_custom_call.1} parent=1 // pred_check
      _
    $region3: #{tpu_custom_call.1} parent=1 // pred_check_branch
      %11 = sbr.rel (0) target = $region5
    $region4: #{tpu_custom_call.1} parent=1 // pred_region
      %s13 = ssub.s32 16, 16
      %14 = vsyncadd [#allocation5], %s13
      %17 = dma.hbm_to_smem %s0, 16, [#allocation2], [#allocation5]
    $region5: #{tpu_custom_call.1} parent=1 // pred_fallthru
      _
    // Predicated region
    $region6: #{tpu_custom_call.1} parent=1 // pred_check
      _
    $region7: #{tpu_custom_call.1} parent=1 // pred_check_branch
      %19 = sbr.rel (0) target = $region9
    $region8: #{tpu_custom_call.1} parent=1 // pred_region
      %s21 = ssub.s32 512, 512
      %22 = vsyncadd [#allocation3], %s21
      %s23 = sshll.u32 [#allocation6], 4
      %s24 = int_to_ptr.vmem [resolvable:$true] %s23
      %29 = dma.hbm_to_vmem [thread:$0]  %s1, 512, %s24, [#allocation3], 128, 128, 8
    $region9: #{tpu_custom_call.1} parent=1 // pred_fallthru
      _
    // Predicated region
    $region10: #{tpu_custom_call.1} parent=1 // pred_check
      _
    $region11: #{tpu_custom_call.1} parent=1 // pred_check_branch
      %31 = sbr.rel (0) target = $region13
    $region12: #{tpu_custom_call.1} parent=1 // pred_region
      %32 = dma.done [#allocation5], 16
    $region13: #{tpu_custom_call.1} parent=1 // pred_fallthru
      _
    // Predicated region
    $region14: #{tpu_custom_call.1} parent=1 // pred_check
      _
    $region15: #{tpu_custom_call.1} parent=1 // pred_check_branch
      %34 = sbr.rel (0) target = $region17
    $region16: #{tpu_custom_call.1} parent=1 // pred_region
      %35 = dma.done [#allocation3], 512
    $region17: #{tpu_custom_call.1} parent=1 // pred_fallthru
      _
    %36 = sfence
    %s37 = sld [smem:[#allocation2]]
    %s38 = sld [smem:[#allocation2 + $0x1]]
    %s39 = sld [smem:[#allocation2 + $0x2]]
    %v40 = vld [vmem:[#allocation6] sm:$0xff]
    %v41 = vld [vmem:[#allocation6 + $0x8] sm:$0xff]
    %v42 = vld [vmem:[#allocation6 + $0x10] sm:$0xff]
    %v43 = vld [vmem:[#allocation6 + $0x18] sm:$0xff]
    %v44 = vstv %s38
    %v45 = vmul.f32 %v44, %v40
    %v46 = vmul.f32 %v44, %v41
    %v47 = vmul.f32 %v44, %v42
    %v48 = vmul.f32 %v44, %v43
    %v49 = vstv %s37
    %v50 = vadd.f32 %v45, %v49
    %v51 = vadd.f32 %v46, %v49
    %v52 = vadd.f32 %v47, %v49
    %v53 = vadd.f32 %v48, %v49
    %v54 = vmul.f32 %v50, %v40
    %v55 = vmul.f32 %v51, %v41
    %v56 = vmul.f32 %v52, %v42
    %v57 = vmul.f32 %v53, %v43
    %v58 = vstv %s39
    %v59 = vadd.f32 %v54, %v58
    %v60 = vadd.f32 %v55, %v58
    %v61 = vadd.f32 %v56, %v58
    %v62 = vadd.f32 %v57, %v58
    %63 = vst [vmem:[#allocation7] sm:$0xff] %v59
    %64 = vst [vmem:[#allocation7 + $0x8] sm:$0xff] %v60
    %65 = vst [vmem:[#allocation7 + $0x10] sm:$0xff] %v61
    %66 = vst [vmem:[#allocation7 + $0x18] sm:$0xff] %v62
    // Predicated region
    $region18: #{tpu_custom_call.1} parent=1 // pred_check
      _
    $region19: #{tpu_custom_call.1} parent=1 // pred_check_branch
      %68 = sbr.rel (0) target = $region21
    $region20: #{tpu_custom_call.1} parent=1 // pred_region
      %s70 = ssub.s32 512, 512
      %71 = vsyncadd [#allocation4], %s70
      %s72 = sshll.u32 [#allocation7], 4
      %s73 = int_to_ptr.vmem [resolvable:$true] %s72
      %78 = dma.vmem_to_hbm [thread:$0]  %s73, 512, %s2, [#allocation4], 128, 128, 8
    $region21: #{tpu_custom_call.1} parent=1 // pred_fallthru
      _
    // Predicated region
    $region22: #{tpu_custom_call.1} parent=1 // pred_check
      _
    $region23: #{tpu_custom_call.1} parent=1 // pred_check_branch
      %80 = sbr.rel (0) target = $region25
    $region24: #{tpu_custom_call.1} parent=1 // pred_region
      %81 = dma.done [#allocation4], 512
    $region25: #{tpu_custom_call.1} parent=1 // pred_fallthru
      _
    %82 = vsyncpa [#allocation3], 1
    %83 = vsyncpa [#allocation4], 1
    %84 = vsyncpa [#allocation5], 1

</llo_original>
